<compile_context>
chip_gen: v7x
topology: tpu7x:2x2x1
jax: 0.10.0
libtpu: 0.0.40
codegen_flags: <defaults>
</compile_context>

<pallas_src>
import functools

import jax
import jax.numpy as jnp
from jax.experimental import pallas as pl
from jax.experimental.pallas import tpu as pltpu

LANE = 128


def _dice_kernel(preds_ref, targets_ref, out_ref, acc_ref, *,
                 n_spatial, valid_in_last, masked, prereduce):
    s = pl.program_id(1)

    @pl.when(s == 0)
    def _():
        acc_ref[...] = jnp.zeros_like(acc_ref)

    nb, C, tr, lane = preds_ref.shape

    # Class-1 probability via max-free softmax:
    #   softmax(p)[1] = 1 / (1 + sum_{c != 1} exp(p_c - p_1))
    # Per-channel ref reads -> no (nb, C, tr, 128) f32 temp in registers.
    p1_logit = preds_ref[:, 1].astype(jnp.float32)            # (nb, tr, lane)
    denom = jnp.ones_like(p1_logit)                           # the c == 1 term
    for c in range(C):                                        # static unroll, C-1 exps
        if c == 1:
            continue
        pc = preds_ref[:, c].astype(jnp.float32)
        # Clip keeps denom finite (exp(80) ~ 5.5e34) so the Newton-refined
        # reciprocal never sees inf; p1 on such pixels is ~1e-35 ~= 0.
        denom = denom + jnp.exp(jnp.minimum(pc - p1_logit, 80.0))

    # Reciprocal on the EUP slot + one Newton step (~1e-8 relative error).
    r = pl.reciprocal(denom, approx=True)
    p1 = r * (2.0 - denom * r)

    # Labels arrive in their native integer width; upcast in-register for the compare.
    t = (targets_ref[...].astype(jnp.int32) == 1).astype(jnp.float32)  # (nb, tr, lane)

    if prereduce:
        g = (nb * tr) // 8

        def _pre(x):                                          # pure cross-vreg VPU adds
            return jnp.sum(x.reshape(g, 8, lane), axis=0)     # -> (8, lane)
    else:
        def _pre(x):                                          # tiny full-extent tiles
            return x

    def _accumulate(apply_mask):
        p1v, tv = p1, t
        if apply_mask:
            # Only the last spatial tile can contain padding.
            row = jax.lax.broadcasted_iota(jnp.int32, (nb, tr, lane), 1)
            col = jax.lax.broadcasted_iota(jnp.int32, (nb, tr, lane), 2)
            valid = ((row * lane + col) < valid_in_last).astype(jnp.float32)
            p1v = p1v * valid
            tv = tv * valid
        acc_ref[0] += _pre(p1v * tv)      # intersection
        acc_ref[1] += _pre(p1v)           # preds.sum()
        acc_ref[2] += _pre(tv)            # targets.sum()

    if masked:
        @pl.when(s == n_spatial - 1)
        def _():
            _accumulate(True)

        if n_spatial > 1:
            @pl.when(s != n_spatial - 1)
            def _():
                _accumulate(False)
    else:
        _accumulate(False)

    @pl.when(s == n_spatial - 1)
    def _():
        # One cross-lane reduce per batch block; scalars go to the SMEM out block.
        out_ref[0, 0] = jnp.sum(acc_ref[0])
        out_ref[0, 1] = jnp.sum(acc_ref[1])
        out_ref[0, 2] = jnp.sum(acc_ref[2])


def _pick_tr(rows, max_rows):
    """Pick the spatial tile (rows per tile). Returns (tr, rows_pad)."""
    if rows <= max_rows:
        return rows, rows                      # single full-extent spatial tile
    cap = max_rows - max_rows % 8
    # Prefer a divisor of rows (multiple of 8) -> no wrapper pad pass over preds.
    for d in range(cap, max(cap // 4, 8) - 1, -8):
        if rows % d == 0:
            return d, rows
    return cap, pl.cdiv(rows, cap) * cap       # fall back to padded rows + mask


def dice_loss(preds, targets, smooth=1e-6, *, max_rows_per_tile=1024,
              target_block_bytes=4 << 20):
    """preds: (N, C, H, W) float (f32 or bf16), targets: (N, H, W) int (int8..int32).
    Returns scalar f32 loss matching DiceLoss.forward."""
    N, C, H, W = preds.shape
    assert C >= 2, "DiceLoss uses softmax class 1; needs C >= 2"
    HW = H * W

    rows = pl.cdiv(HW, LANE)
    tr, rows_pad = _pick_tr(rows, max_rows_per_tile)
    hw_pad = rows_pad * LANE
    masked = hw_pad != HW

    p = preds.reshape(N, C, HW)
    t = targets.reshape(N, HW)                 # native integer width (int8 ok)
    if masked:
        p = jnp.pad(p, ((0, 0), (0, 0), (0, hw_pad - HW)))
        t = jnp.pad(t, ((0, 0), (0, hw_pad - HW)))        # pad label 0 (!= 1)
    p = p.reshape(N, C, rows_pad, LANE)
    t = t.reshape(N, rows_pad, LANE)

    # Fold batch elements per block up to ~target_block_bytes per grid step.
    # nb must divide N so no batch padding/masking is ever needed.
    per_batch_bytes = tr * LANE * (C * p.dtype.itemsize + t.dtype.itemsize)
    nb = 1
    for d in range(N, 0, -1):
        if N % d == 0 and d * per_batch_bytes <= target_block_bytes:
            nb = d
            break

    n_batch = N // nb
    n_spatial = rows_pad // tr
    prereduce = (tr % 8 == 0)
    acc_shape = (3, 8, LANE) if prereduce else (3, nb, tr, LANE)
    valid_in_last = HW - (n_spatial - 1) * tr * LANE

    kernel = functools.partial(
        _dice_kernel,
        n_spatial=n_spatial,
        valid_in_last=valid_in_last,
        masked=masked,
        prereduce=prereduce,
    )

    partial = pl.pallas_call(
        kernel,
        out_shape=jax.ShapeDtypeStruct((n_batch, 3), jnp.float32),
        grid_spec=pltpu.PrefetchScalarGridSpec(
            num_scalar_prefetch=0,
            grid=(n_batch, n_spatial),
            in_specs=[
                pl.BlockSpec((nb, C, tr, LANE), lambda b, s: (b, 0, s, 0)),
                pl.BlockSpec((nb, tr, LANE), lambda b, s: (b, s, 0)),
            ],
            out_specs=pl.BlockSpec((1, 3), lambda b, s: (b, 0),
                                   memory_space=pltpu.SMEM),
            scratch_shapes=[pltpu.VMEM(acc_shape, jnp.float32)],
        ),
        compiler_params=pltpu.CompilerParams(
            # Batch axis parallel -> v7x can split batch blocks across its 2 TCs;
            # spatial axis carries the accumulator, so it stays arbitrary.
            dimension_semantics=("parallel", "arbitrary"),
            # 32 MiB keeps double-buffered <=4 MiB input blocks + scratch safe on
            # v7x's 64 MiB physical VMEM as well as v5e/v6e.
            vmem_limit_bytes=32 * 1024 * 1024,
        ),
    )(p, t)

    sums = jnp.sum(partial, axis=0)            # (3,) : inter, preds.sum, targets.sum
    dice = (2.0 * sums[0] + float(smooth)) / (sums[1] + sums[2] + float(smooth))
    return 1.0 - dice


def dice_loss_ref(preds, targets, smooth=1e-6):
    sm = jax.nn.softmax(preds.astype(jnp.float32), axis=1)[:, 1, :, :]
    t = (targets == 1).astype(jnp.float32)
    inter = jnp.sum(sm * t)
    dice = (2.0 * inter + smooth) / (jnp.sum(sm) + jnp.sum(t) + smooth)
    return 1.0 - dice


if __name__ == "__main__":
    key = jax.random.PRNGKey(0)
    k1, k2, k3, k4, k5, k6 = jax.random.split(key, 6)

    # 1) Base case: NCHW logits + NHW integer labels, lane-aligned spatial.
    N, C, H, W = 2, 4, 16, 16
    preds = jax.random.normal(k1, (N, C, H, W), dtype=jnp.float32)
    targets = jax.random.randint(k2, (N, H, W), 0, C, dtype=jnp.int32)
    loss = dice_loss(preds, targets)
    jax.block_until_ready(loss)
    ref = dice_loss_ref(preds, targets)
    assert jnp.allclose(loss, ref, atol=1e-5, rtol=1e-5), (loss, ref)

    # 2) Unaligned spatial (H*W % 128 != 0) -> padded + masked last tile.
    preds2 = jax.random.normal(k3, (3, 3, 10, 12), dtype=jnp.float32)
    targets2 = jax.random.randint(k4, (3, 10, 12), 0, 3, dtype=jnp.int32)
    loss2 = dice_loss(preds2, targets2)
    jax.block_until_ready(loss2)
    ref2 = dice_loss_ref(preds2, targets2)
    assert jnp.allclose(loss2, ref2, atol=1e-5, rtol=1e-5), (loss2, ref2)

    # 3) Reduced-precision path: bf16 logits + int8 labels (less HBM traffic).
    preds3 = jax.random.normal(k5, (N, C, H, W), dtype=jnp.bfloat16)
    targets3 = jax.random.randint(k6, (N, H, W), 0, C, dtype=jnp.int8)
    loss3 = dice_loss(preds3, targets3)
    jax.block_until_ready(loss3)
    ref3 = dice_loss_ref(preds3, targets3)
    assert jnp.allclose(loss3, ref3, atol=1e-5, rtol=1e-5), (loss3, ref3)

    # 4) Multi-tile spatial path (forced small tile) + masked last tile + pre-reduce.
    preds4 = jax.random.normal(k1, (2, 4, 60, 60), dtype=jnp.float32)
    targets4 = jax.random.randint(k2, (2, 60, 60), 0, 4, dtype=jnp.int32)
    loss4 = dice_loss(preds4, targets4, max_rows_per_tile=8)
    jax.block_until_ready(loss4)
    ref4 = dice_loss_ref(preds4, targets4)
    assert jnp.allclose(loss4, ref4, atol=1e-5, rtol=1e-5), (loss4, ref4)

    print("KERNEL_OK")
</pallas_src>

<mosaic_0001>
module attributes {stable_mosaic.version = 11 : i64} {
  func.func @_dice_kernel(%arg0: i32, %arg1: i32, %arg2: memref<2x4x2x128xf32, #tpu.memory_space<vmem>>, %arg3: memref<2x2x128xi32, #tpu.memory_space<vmem>>, %arg4: memref<1x3xf32, #tpu.memory_space<smem>>, %arg5: memref<3x2x2x128xf32, #tpu.memory_space<vmem>>) attributes {dimension_semantics = [#tpu.dimension_semantics<parallel>, #tpu.dimension_semantics<arbitrary>], iteration_bounds = array<i64: 1, 1>, scalar_prefetch = 0 : i64, scratch_operands = 1 : i64, tpu.core_type = #tpu.core_type<tc>, window_params = [{transform_indices = @transform_0, window_bounds = array<i64: 2, 4, 2, 128>}, {transform_indices = @transform_1, window_bounds = array<i64: 2, 2, 128>}, {transform_indices = @transform_2, window_bounds = array<i64: 1, 3>}]} {
    %c0_i32 = arith.constant 0 : i32
    %0 = arith.cmpi eq, %arg1, %c0_i32 : i32
    %1 = arith.extui %0 : i1 to i32
    %c0_i32_0 = arith.constant 0 : i32
    %2 = arith.cmpi ne, %1, %c0_i32_0 : i32
    scf.if %2 {
      %cst_46 = arith.constant 0.000000e+00 : f32
      %59 = vector.broadcast %cst_46 : f32 to vector<3x2x2x128xf32>
      %c0_47 = arith.constant 0 : index
      %c0_48 = arith.constant 0 : index
      %c0_49 = arith.constant 0 : index
      %c0_50 = arith.constant 0 : index
      %60 = vector.load %arg5[%c0_47, %c0_48, %c0_49, %c0_50] : memref<3x2x2x128xf32, #tpu.memory_space<vmem>>, vector<3x2x2x128xf32>
      tpu.vector_store %arg5[%c0_47, %c0_48, %c0_49, %c0_50], %59 {strides = array<i32>} : memref<3x2x2x128xf32, #tpu.memory_space<vmem>>, vector<3x2x2x128xf32>,
    } else {
    }
    %c0 = arith.constant 0 : index
    %c1 = arith.constant 1 : index
    %c0_1 = arith.constant 0 : index
    %c0_2 = arith.constant 0 : index
    %3 = vector.load %arg2[%c0, %c1, %c0_1, %c0_2] : memref<2x4x2x128xf32, #tpu.memory_space<vmem>>, vector<2x1x2x128xf32>
    %4 = vector.shape_cast %3 : vector<2x1x2x128xf32> to vector<2x2x128xf32>
    %cst = arith.constant 1.000000e+00 : f32
    %5 = vector.broadcast %cst : f32 to vector<2x2x128xf32>
    %c0_3 = arith.constant 0 : index
    %c0_4 = arith.constant 0 : index
    %c0_5 = arith.constant 0 : index
    %c0_6 = arith.constant 0 : index
    %6 = vector.load %arg2[%c0_3, %c0_4, %c0_5, %c0_6] : memref<2x4x2x128xf32, #tpu.memory_space<vmem>>, vector<2x1x2x128xf32>
    %7 = vector.shape_cast %6 : vector<2x1x2x128xf32> to vector<2x2x128xf32>
    %8 = arith.subf %7, %4 : vector<2x2x128xf32>
    %cst_7 = arith.constant 8.000000e+01 : f32
    %9 = vector.broadcast %cst_7 : f32 to vector<2x2x128xf32>
    %10 = arith.minimumf %8, %9 : vector<2x2x128xf32>
    %11 = math.exp %10 : vector<2x2x128xf32>
    %12 = arith.addf %5, %11 : vector<2x2x128xf32>
    %c0_8 = arith.constant 0 : index
    %c2 = arith.constant 2 : index
    %c0_9 = arith.constant 0 : index
    %c0_10 = arith.constant 0 : index
    %13 = vector.load %arg2[%c0_8, %c2, %c0_9, %c0_10] : memref<2x4x2x128xf32, #tpu.memory_space<vmem>>, vector<2x1x2x128xf32>
    %14 = vector.shape_cast %13 : vector<2x1x2x128xf32> to vector<2x2x128xf32>
    %15 = arith.subf %14, %4 : vector<2x2x128xf32>
    %cst_11 = arith.constant 8.000000e+01 : f32
    %16 = vector.broadcast %cst_11 : f32 to vector<2x2x128xf32>
    %17 = arith.minimumf %15, %16 : vector<2x2x128xf32>
    %18 = math.exp %17 : vector<2x2x128xf32>
    %19 = arith.addf %12, %18 : vector<2x2x128xf32>
    %c0_12 = arith.constant 0 : index
    %c3 = arith.constant 3 : index
    %c0_13 = arith.constant 0 : index
    %c0_14 = arith.constant 0 : index
    %20 = vector.load %arg2[%c0_12, %c3, %c0_13, %c0_14] : memref<2x4x2x128xf32, #tpu.memory_space<vmem>>, vector<2x1x2x128xf32>
    %21 = vector.shape_cast %20 : vector<2x1x2x128xf32> to vector<2x2x128xf32>
    %22 = arith.subf %21, %4 : vector<2x2x128xf32>
    %cst_15 = arith.constant 8.000000e+01 : f32
    %23 = vector.broadcast %cst_15 : f32 to vector<2x2x128xf32>
    %24 = arith.minimumf %22, %23 : vector<2x2x128xf32>
    %25 = math.exp %24 : vector<2x2x128xf32>
    %26 = arith.addf %19, %25 : vector<2x2x128xf32>
    %27 = tpu.reciprocal %26 {approx = true} : vector<2x2x128xf32> -> vector<2x2x128xf32>
    %28 = arith.mulf %26, %27 : vector<2x2x128xf32>
    %cst_16 = arith.constant 2.000000e+00 : f32
    %29 = vector.broadcast %cst_16 : f32 to vector<2x2x128xf32>
    %30 = arith.subf %29, %28 : vector<2x2x128xf32>
    %31 = arith.mulf %27, %30 : vector<2x2x128xf32>
    %c0_17 = arith.constant 0 : index
    %c0_18 = arith.constant 0 : index
    %c0_19 = arith.constant 0 : index
    %32 = vector.load %arg3[%c0_17, %c0_18, %c0_19] : memref<2x2x128xi32, #tpu.memory_space<vmem>>, vector<2x2x128xi32>
    %c1_i32 = arith.constant 1 : i32
    %33 = vector.broadcast %c1_i32 : i32 to vector<2x2x128xi32>
    %34 = arith.cmpi eq, %32, %33 : vector<2x2x128xi32>
    %35 = arith.extui %34 : vector<2x2x128xi1> to vector<2x2x128xi32>
    %36 = arith.sitofp %35 : vector<2x2x128xi32> to vector<2x2x128xf32>
    %c0_20 = arith.constant 0 : index
    %c0_21 = arith.constant 0 : index
    %c0_22 = arith.constant 0 : index
    %c0_23 = arith.constant 0 : index
    %37 = vector.load %arg5[%c0_20, %c0_21, %c0_22, %c0_23] : memref<3x2x2x128xf32, #tpu.memory_space<vmem>>, vector<1x2x2x128xf32>
    %38 = vector.shape_cast %37 : vector<1x2x2x128xf32> to vector<2x2x128xf32>
    %39 = arith.mulf %31, %36 : vector<2x2x128xf32>
    %40 = arith.addf %38, %39 : vector<2x2x128xf32>
    %c0_24 = arith.constant 0 : index
    %c0_25 = arith.constant 0 : index
    %c0_26 = arith.constant 0 : index
    %c0_27 = arith.constant 0 : index
    %41 = vector.load %arg5[%c0_24, %c0_25, %c0_26, %c0_27] : memref<3x2x2x128xf32, #tpu.memory_space<vmem>>, vector<1x2x2x128xf32>
    %42 = vector.shape_cast %41 : vector<1x2x2x128xf32> to vector<2x2x128xf32>
    %43 = vector.shape_cast %40 : vector<2x2x128xf32> to vector<1x2x2x128xf32>
    tpu.vector_store %arg5[%c0_24, %c0_25, %c0_26, %c0_27], %43 {strides = array<i32>} : memref<3x2x2x128xf32, #tpu.memory_space<vmem>>, vector<1x2x2x128xf32>,
    %c1_28 = arith.constant 1 : index
    %c0_29 = arith.constant 0 : index
    %c0_30 = arith.constant 0 : index
    %c0_31 = arith.constant 0 : index
    %44 = vector.load %arg5[%c1_28, %c0_29, %c0_30, %c0_31] : memref<3x2x2x128xf32, #tpu.memory_space<vmem>>, vector<1x2x2x128xf32>
    %45 = vector.shape_cast %44 : vector<1x2x2x128xf32> to vector<2x2x128xf32>
    %46 = arith.addf %45, %31 : vector<2x2x128xf32>
    %c1_32 = arith.constant 1 : index
    %c0_33 = arith.constant 0 : index
    %c0_34 = arith.constant 0 : index
    %c0_35 = arith.constant 0 : index
    %47 = vector.load %arg5[%c1_32, %c0_33, %c0_34, %c0_35] : memref<3x2x2x128xf32, #tpu.memory_space<vmem>>, vector<1x2x2x128xf32>
    %48 = vector.shape_cast %47 : vector<1x2x2x128xf32> to vector<2x2x128xf32>
    %49 = vector.shape_cast %46 : vector<2x2x128xf32> to vector<1x2x2x128xf32>
    tpu.vector_store %arg5[%c1_32, %c0_33, %c0_34, %c0_35], %49 {strides = array<i32>} : memref<3x2x2x128xf32, #tpu.memory_space<vmem>>, vector<1x2x2x128xf32>,
    %c2_36 = arith.constant 2 : index
    %c0_37 = arith.constant 0 : index
    %c0_38 = arith.constant 0 : index
    %c0_39 = arith.constant 0 : index
    %50 = vector.load %arg5[%c2_36, %c0_37, %c0_38, %c0_39] : memref<3x2x2x128xf32, #tpu.memory_space<vmem>>, vector<1x2x2x128xf32>
    %51 = vector.shape_cast %50 : vector<1x2x2x128xf32> to vector<2x2x128xf32>
    %52 = arith.addf %51, %36 : vector<2x2x128xf32>
    %c2_40 = arith.constant 2 : index
    %c0_41 = arith.constant 0 : index
    %c0_42 = arith.constant 0 : index
    %c0_43 = arith.constant 0 : index
    %53 = vector.load %arg5[%c2_40, %c0_41, %c0_42, %c0_43] : memref<3x2x2x128xf32, #tpu.memory_space<vmem>>, vector<1x2x2x128xf32>
    %54 = vector.shape_cast %53 : vector<1x2x2x128xf32> to vector<2x2x128xf32>
    %55 = vector.shape_cast %52 : vector<2x2x128xf32> to vector<1x2x2x128xf32>
    tpu.vector_store %arg5[%c2_40, %c0_41, %c0_42, %c0_43], %55 {strides = array<i32>} : memref<3x2x2x128xf32, #tpu.memory_space<vmem>>, vector<1x2x2x128xf32>,
    %c0_i32_44 = arith.constant 0 : i32
    %56 = arith.cmpi eq, %arg1, %c0_i32_44 : i32
    %57 = arith.extui %56 : i1 to i32
    %c0_i32_45 = arith.constant 0 : i32
    %58 = arith.cmpi ne, %57, %c0_i32_45 : i32
    scf.if %58 {
      %c0_46 = arith.constant 0 : index
      %c0_47 = arith.constant 0 : index
      %c0_48 = arith.constant 0 : index
      %c0_49 = arith.constant 0 : index
      %59 = vector.load %arg5[%c0_46, %c0_47, %c0_48, %c0_49] : memref<3x2x2x128xf32, #tpu.memory_space<vmem>>, vector<1x2x2x128xf32>
      %60 = vector.shape_cast %59 : vector<1x2x2x128xf32> to vector<2x2x128xf32>
      %61 = vector.shape_cast %60 : vector<2x2x128xf32> to vector<1x2x2x128xf32>
      %cst_50 = arith.constant dense<0.000000e+00> : vector<1xf32>
      %62 = vector.multi_reduction <add>, %61, %cst_50 [1, 2, 3] : vector<1x2x2x128xf32> to vector<1xf32>
      %63 = vector.shape_cast %62 : vector<1xf32> to vector<1x1x1x1xf32>
      %64 = vector.extract %63[0, 0, 0, 0] : f32 from vector<1x1x1x1xf32>
      %c0_51 = arith.constant 0 : index
      %c0_52 = arith.constant 0 : index
      %65 = memref.load %arg4[%c0_51, %c0_52] : memref<1x3xf32, #tpu.memory_space<smem>>
      memref.store %64, %arg4[%c0_51, %c0_52] : memref<1x3xf32, #tpu.memory_space<smem>>
      %c1_53 = arith.constant 1 : index
      %c0_54 = arith.constant 0 : index
      %c0_55 = arith.constant 0 : index
      %c0_56 = arith.constant 0 : index
      %66 = vector.load %arg5[%c1_53, %c0_54, %c0_55, %c0_56] : memref<3x2x2x128xf32, #tpu.memory_space<vmem>>, vector<1x2x2x128xf32>
      %67 = vector.shape_cast %66 : vector<1x2x2x128xf32> to vector<2x2x128xf32>
      %68 = vector.shape_cast %67 : vector<2x2x128xf32> to vector<1x2x2x128xf32>
      %cst_57 = arith.constant dense<0.000000e+00> : vector<1xf32>
      %69 = vector.multi_reduction <add>, %68, %cst_57 [1, 2, 3] : vector<1x2x2x128xf32> to vector<1xf32>
      %70 = vector.shape_cast %69 : vector<1xf32> to vector<1x1x1x1xf32>
      %71 = vector.extract %70[0, 0, 0, 0] : f32 from vector<1x1x1x1xf32>
      %c0_58 = arith.constant 0 : index
      %c1_59 = arith.constant 1 : index
      %72 = memref.load %arg4[%c0_58, %c1_59] : memref<1x3xf32, #tpu.memory_space<smem>>
      memref.store %71, %arg4[%c0_58, %c1_59] : memref<1x3xf32, #tpu.memory_space<smem>>
      %c2_60 = arith.constant 2 : index
      %c0_61 = arith.constant 0 : index
      %c0_62 = arith.constant 0 : index
      %c0_63 = arith.constant 0 : index
      %73 = vector.load %arg5[%c2_60, %c0_61, %c0_62, %c0_63] : memref<3x2x2x128xf32, #tpu.memory_space<vmem>>, vector<1x2x2x128xf32>
      %74 = vector.shape_cast %73 : vector<1x2x2x128xf32> to vector<2x2x128xf32>
      %75 = vector.shape_cast %74 : vector<2x2x128xf32> to vector<1x2x2x128xf32>
      %cst_64 = arith.constant dense<0.000000e+00> : vector<1xf32>
      %76 = vector.multi_reduction <add>, %75, %cst_64 [1, 2, 3] : vector<1x2x2x128xf32> to vector<1xf32>
      %77 = vector.shape_cast %76 : vector<1xf32> to vector<1x1x1x1xf32>
      %78 = vector.extract %77[0, 0, 0, 0] : f32 from vector<1x1x1x1xf32>
      %c0_65 = arith.constant 0 : index
      %c2_66 = arith.constant 2 : index
      %79 = memref.load %arg4[%c0_65, %c2_66] : memref<1x3xf32, #tpu.memory_space<smem>>
      memref.store %78, %arg4[%c0_65, %c2_66] : memref<1x3xf32, #tpu.memory_space<smem>>
    } else {
    }
    return
  }
  func.func @transform_0(%arg0: i32, %arg1: i32) -> (i32, i32, i32, i32) {
    %c0_i32 = arith.constant 0 : i32
    %c0_i32_0 = arith.constant 0 : i32
    %c0_i32_1 = arith.constant 0 : i32
    return %arg0, %c0_i32, %arg1, %c0_i32_0 : i32, i32, i32, i32
  }
  func.func @transform_1(%arg0: i32, %arg1: i32) -> (i32, i32, i32) {
    %c0_i32 = arith.constant 0 : i32
    %c0_i32_0 = arith.constant 0 : i32
    return %arg0, %arg1, %c0_i32 : i32, i32, i32
  }
  func.func @transform_2(%arg0: i32, %arg1: i32) -> (i32, i32) {
    %c0_i32 = arith.constant 0 : i32
    %c0_i32_0 = arith.constant 0 : i32
    return %arg0, %c0_i32 : i32, i32
  }
}

</mosaic_0001>

<llo_original>
// kernel: tpu_custom_call.1
$region0: #{tpu_custom_call.1}
  #allocation0 [shape = 'u32[]', space=smem, size = 0x4, offset = 0x4, fixed_abs, tag = 'smem constant byte address 0x4 - core index']
  #allocation1 [shape = 'u32[144,128]{1,0:T(1,128)}', space=vmem, size = 0x12000, scoped, tag = 'internal scratch']
  #allocation2 [shape = 'f32[3,2,2,128]{3,2,1,0:T(2,128)}', space=vmem, size = 0x1800, scoped, tag = 'scratch operand']
  %s0 = inlined_call_operand.hbm [shape: f32[2,4,2,128], index: 0, kind: input, shape index: {}]
  %s1 = inlined_call_operand.hbm [shape: s32[2,2,128], index: 1, kind: input, shape index: {}]
  %s2 = inlined_call_operand.hbm [shape: f32[1,3], index: 2, kind: output, shape index: {}]
  %s3 = sld [smem:[#allocation0]]
  $region34: #{tpu_custom_call.1} parent=0
    _
  %s5 = ssub.s32 1, %s3
  %s6 = scalar_select 0, %s5, %s3
  $region1: #{tpu_custom_call.1} parent=0
    #allocation3 [shape = 'u8[8192]{0}', space=vmem, size = 0x2000, scoped, tag = 'input window, operand 0, single buffered']
    #allocation4 [shape = 's32[1]{0}', space=sflag, size = 0x4, scoped, tag = 'scoped memory for tpu_custom_call.1']
    #allocation5 [shape = 's32[1]{0}', space=sflag, size = 0x4, scoped, tag = 'scoped memory for tpu_custom_call.1']
    #allocation6 [shape = 'u8[2048]{0}', space=vmem, size = 0x800, scoped, tag = 'input window, operand 1, single buffered']
    #allocation7 [shape = 's32[1]{0}', space=sflag, size = 0x4, scoped, tag = 'scoped memory for tpu_custom_call.1']
    #allocation8 [shape = 'u8[512]{0}', space=smem, size = 0x200, scoped, tag = 'output window, operand 0, single buffered']
    %7 = vsyncpa [#allocation4], 0
    %8 = vsyncpa [#allocation7], 0
    %9 = vsyncpa [#allocation5], 0
    // Predicated region
    $region2: #{tpu_custom_call.1} parent=1 // pred_check
      _
    $region3: #{tpu_custom_call.1} parent=1 // pred_check_branch
      %11 = sbr.rel (0) target = $region5
    $region4: #{tpu_custom_call.1} parent=1 // pred_region
      %s13 = ssub.s32 256, 256
      %14 = vsyncadd [#allocation4], %s13
      %s15 = sshll.u32 [#allocation3], 4
      %s16 = int_to_ptr.vmem [resolvable:$true] %s15
      %21 = dma.hbm_to_vmem [thread:$0]  %s0, 256, %s16, [#allocation4], 32, 32, 2
    $region5: #{tpu_custom_call.1} parent=1 // pred_fallthru
      _
    // Predicated region
    $region6: #{tpu_custom_call.1} parent=1 // pred_check
      _
    $region7: #{tpu_custom_call.1} parent=1 // pred_check_branch
      %23 = sbr.rel (0) target = $region9
    $region8: #{tpu_custom_call.1} parent=1 // pred_region
      %s25 = ssub.s32 64, 64
      %26 = vsyncadd [#allocation7], %s25
      %s27 = sshll.u32 [#allocation6], 4
      %s28 = int_to_ptr.vmem [resolvable:$true] %s27
      %33 = dma.hbm_to_vmem [thread:$0]  %s1, 64, %s28, [#allocation7], 32, 32, 2
    $region9: #{tpu_custom_call.1} parent=1 // pred_fallthru
      _
    // Predicated region
    $region10: #{tpu_custom_call.1} parent=1 // pred_check
      _
    $region11: #{tpu_custom_call.1} parent=1 // pred_check_branch
      %35 = sbr.rel (0) target = $region13
    $region12: #{tpu_custom_call.1} parent=1 // pred_region
      %36 = dma.done [#allocation4], 256
    $region13: #{tpu_custom_call.1} parent=1 // pred_fallthru
      _
    // Predicated region
    $region14: #{tpu_custom_call.1} parent=1 // pred_check
      _
    $region15: #{tpu_custom_call.1} parent=1 // pred_check_branch
      %38 = sbr.rel (0) target = $region17
    $region16: #{tpu_custom_call.1} parent=1 // pred_region
      %39 = dma.done [#allocation7], 64
    $region17: #{tpu_custom_call.1} parent=1 // pred_fallthru
      _
    %p40 = scmp.eq.s32.totalorder 0, 0
    // Predicated region
    $region18: #{tpu_custom_call.1} parent=1 // pred_check
      %p41 = pneg %p40
    $region19: #{tpu_custom_call.1} parent=1 // pred_check_branch
      %43 = sbr.rel (%p41) target = $region21
    $region20: #{tpu_custom_call.1} parent=1 // pred_region
      %44 = vst [vmem:[#allocation2] sm:$0x3] 0.0
      %45 = vst [vmem:[#allocation2 + $0x2] sm:$0x3] 0.0
      %46 = vst [vmem:[#allocation2 + $0x4] sm:$0x3] 0.0
      %47 = vst [vmem:[#allocation2 + $0x6] sm:$0x3] 0.0
      %48 = vst [vmem:[#allocation2 + $0x8] sm:$0x3] 0.0
      %49 = vst [vmem:[#allocation2 + $0xa] sm:$0x3] 0.0
    $region21: #{tpu_custom_call.1} parent=1 // pred_fallthru
      _
    %s50 = scalar_lea.vmem [#allocation3], 2
    %v51 = vld [vmem:[%s50] sm:$0x3]
    %v52 = vld [vmem:[%s50 + $0x8] sm:$0x3]
    %v53 = vld [vmem:[#allocation3] sm:$0x3]
    %v54 = vld [vmem:[#allocation3 + $0x8] sm:$0x3]
    %v55 = vsub.f32 %v53, %v51
    %v56 = vsub.f32 %v54, %v52
    %v57 = vmin.f32 %v55, 80.0
    %v58 = vmin.f32 %v56, 80.0
    %v59 = vmul.f32 %v57, 1.442695
    %v60 = vpow.pop %v59
    %v61 = vmul.f32 %v58, 1.442695
    %v62 = vpow.pop %v61
    %v63 = vadd.f32 %v60, 1.0
    %v64 = vadd.f32 %v62, 1.0
    %s65 = scalar_lea.vmem [#allocation3], 4
    %v66 = vld [vmem:[%s65] sm:$0x3]
    %v67 = vld [vmem:[%s65 + $0x8] sm:$0x3]
    %v68 = vsub.f32 %v66, %v51
    %v69 = vsub.f32 %v67, %v52
    %v70 = vmin.f32 %v68, 80.0
    %v71 = vmin.f32 %v69, 80.0
    %v72 = vmul.f32 %v70, 1.442695
    %v73 = vpow.pop %v72
    %v74 = vmul.f32 %v71, 1.442695
    %v75 = vpow.pop %v74
    %v76 = vadd.f32 %v63, %v73
    %v77 = vadd.f32 %v64, %v75
    %s78 = scalar_lea.vmem [#allocation3], 6
    %v79 = vld [vmem:[%s78] sm:$0x3]
    %v80 = vld [vmem:[%s78 + $0x8] sm:$0x3]
    %v81 = vsub.f32 %v79, %v51
    %v82 = vsub.f32 %v80, %v52
    %v83 = vmin.f32 %v81, 80.0
    %v84 = vmin.f32 %v82, 80.0
    %v85 = vmul.f32 %v83, 1.442695
    %v86 = vpow.pop %v85
    %v87 = vmul.f32 %v84, 1.442695
    %v88 = vpow.pop %v87
    %v89 = vadd.f32 %v76, %v86
    %v90 = vadd.f32 %v77, %v88
    %v91 = vrcp.pop %v89
    %v92 = vrcp.pop %v90
    %v93 = vmul.f32 %v89, %v91
    %v94 = vmul.f32 %v90, %v92
    %v95 = vsub.f32 2.0, %v93
    %v96 = vsub.f32 2.0, %v94
    %v97 = vmul.f32 %v91, %v95
    %v98 = vmul.f32 %v92, %v96
    %v99 = vld [vmem:[#allocation6] sm:$0x3]
    %v100 = vld [vmem:[#allocation6 + $0x2] sm:$0x3]
    %vm101 = vcmp.eq.s32.totalorder %v99, 1
    %vm102 = vcmp.eq.s32.totalorder %v100, 1
    %v103 = vsel %vm101, 1, 0
    %v104 = vsel %vm102, 1, 0
    %v105 = vcvt.s32.f32 %v103
    %v106 = vcvt.s32.f32 %v104
    %v107 = vld [vmem:[#allocation2] sm:$0x3]
    %v108 = vld [vmem:[#allocation2 + $0x2] sm:$0x3]
    %v109 = vmul.f32 %v97, %v105
    %v110 = vmul.f32 %v98, %v106
    %v111 = vadd.f32 %v107, %v109
    %v112 = vadd.f32 %v108, %v110
    %113 = vst [vmem:[#allocation2] sm:$0x3] %v111
    %114 = vst [vmem:[#allocation2 + $0x2] sm:$0x3] %v112
    %s115 = scalar_lea.vmem [#allocation2], 4
    %v116 = vld [vmem:[%s115] sm:$0x3]
    %v117 = vld [vmem:[%s115 + $0x2] sm:$0x3]
    %v118 = vadd.f32 %v116, %v97
    %v119 = vadd.f32 %v117, %v98
    %120 = vst [vmem:[%s115] sm:$0x3] %v118
    %121 = vst [vmem:[%s115 + $0x2] sm:$0x3] %v119
    %s122 = scalar_lea.vmem [#allocation2], 8
    %v123 = vld [vmem:[%s122] sm:$0x3]
    %v124 = vld [vmem:[%s122 + $0x2] sm:$0x3]
    %v125 = vadd.f32 %v123, %v105
    %v126 = vadd.f32 %v124, %v106
    %127 = vst [vmem:[%s122] sm:$0x3] %v125
    %128 = vst [vmem:[%s122 + $0x2] sm:$0x3] %v126
    // Predicated region
    $region22: #{tpu_custom_call.1} parent=1 // pred_check
      %p129 = pneg %p40
    $region23: #{tpu_custom_call.1} parent=1 // pred_check_branch
      %131 = sbr.rel (%p129) target = $region25
    $region24: #{tpu_custom_call.1} parent=1 // pred_region
      %v132 = vld [vmem:[#allocation2] sm:$0x3]
      %v133 = vld [vmem:[#allocation2 + $0x2] sm:$0x3]
      %vm134 = vcmask 1041408
      %v135 = vsel %vm134, %v132, 0.0
      %v136 = vsel %vm134, %v133, 0.0
      %v137 = vadd.f32 %v135, %v136
      %138 = vadd.xlane.f32.xlu0 %v137
      %v139 = vpop.xlane.xlu0 %138
      %v140 = vrot.slane %v139, 4
      %v141 = vadd.f32 %v139, %v140
      %v142 = vrot.slane %v141, 2
      %v143 = vadd.f32 %v141, %v142
      %v144 = vrot.slane %v143, 1
      %v145 = vadd.f32 %v143, %v144
      %s146 = vtos %v145
      %s147 = scalar_lea.smem [#allocation8], 0
      %148 = sst [smem:[%s147]] %s146
      %v149 = vld [vmem:[%s115] sm:$0x3]
      %v150 = vld [vmem:[%s115 + $0x2] sm:$0x3]
      %v151 = vsel %vm134, %v149, 0.0
      %v152 = vsel %vm134, %v150, 0.0
      %v153 = vadd.f32 %v151, %v152
      %154 = vadd.xlane.f32.xlu0 %v153
      %v155 = vpop.xlane.xlu0 %154
      %v156 = vrot.slane %v155, 4
      %v157 = vadd.f32 %v155, %v156
      %v158 = vrot.slane %v157, 2
      %v159 = vadd.f32 %v157, %v158
      %v160 = vrot.slane %v159, 1
      %v161 = vadd.f32 %v159, %v160
      %s162 = vtos %v161
      %s163 = scalar_lea.smem [#allocation8], 1
      %164 = sst [smem:[%s163]] %s162
      %v165 = vld [vmem:[%s122] sm:$0x3]
      %v166 = vld [vmem:[%s122 + $0x2] sm:$0x3]
      %v167 = vsel %vm134, %v165, 0.0
      %v168 = vsel %vm134, %v166, 0.0
      %v169 = vadd.f32 %v167, %v168
      %170 = vadd.xlane.f32.xlu0 %v169
      %v171 = vpop.xlane.xlu0 %170
      %v172 = vrot.slane %v171, 4
      %v173 = vadd.f32 %v171, %v172
      %v174 = vrot.slane %v173, 2
      %v175 = vadd.f32 %v173, %v174
      %v176 = vrot.slane %v175, 1
      %v177 = vadd.f32 %v175, %v176
      %s178 = vtos %v177
      %s179 = scalar_lea.smem [#allocation8], 2
      %180 = sst [smem:[%s179]] %s178
    $region25: #{tpu_custom_call.1} parent=1 // pred_fallthru
      _
    // Predicated region
    $region26: #{tpu_custom_call.1} parent=1 // pred_check
      _
    $region27: #{tpu_custom_call.1} parent=1 // pred_check_branch
      %182 = sbr.rel (0) target = $region29
    $region28: #{tpu_custom_call.1} parent=1 // pred_region
      %s184 = ssub.s32 16, 16
      %185 = vsyncadd [#allocation5], %s184
      %188 = dma.smem_to_hbm [#allocation8], 16, %s2, [#allocation5]
    $region29: #{tpu_custom_call.1} parent=1 // pred_fallthru
      _
    // Predicated region
    $region30: #{tpu_custom_call.1} parent=1 // pred_check
      _
    $region31: #{tpu_custom_call.1} parent=1 // pred_check_branch
      %190 = sbr.rel (0) target = $region33
    $region32: #{tpu_custom_call.1} parent=1 // pred_region
      %191 = dma.done [#allocation5], 16
    $region33: #{tpu_custom_call.1} parent=1 // pred_fallthru
      _
    %192 = sfence
    %193 = vsyncpa [#allocation4], 1
    %194 = vsyncpa [#allocation7], 1
    %195 = vsyncpa [#allocation5], 1

</llo_original>
